<compile_context>
chip_gen: v7x
topology: tpu7x:2x2x1
jax: 0.10.0
libtpu: 0.0.40
codegen_flags: <defaults>
</compile_context>

<pallas_src>
import jax
import jax.numpy as jnp
from jax import lax
from jax.experimental import pallas as pl
from jax.experimental.pallas import tpu as pltpu


def _shuffle_tokens_kernel(perm_ref, tok_ref, out_ref):
    """perm_ref: [N] int32 in SMEM (scalar prefetch).
    tok_ref / out_ref: [N, 8, 128] int32 tiles resident in VMEM.

    Single grid step: gather all rows in VMEM.  N is small (tens), so the
    loop is fully unrolled to give the LLO scheduler visibility.
    """
    n = tok_ref.shape[0]

    def body(i, carry):
        out_ref[i] = tok_ref[perm_ref[i]]
        return carry

    lax.fori_loop(0, n, body, 0, unroll=True)


def shuffle_caption(img, tokens, perm):
    """img: any shape/dtype (passed through untouched — no kernel, no copy).
    tokens: [N, 8, 128] int32 encoded prompt tokens.
    perm:   [N] int32 permutation (identity on the first keep_token_num rows).

    NOTE: perm values feed a VMEM row gather; out-of-range / duplicated
    indices must be validated upstream (only DMA-level bounds checks apply).
    """
    N, S, L = tokens.shape

    tok_out = pl.pallas_call(
        _shuffle_tokens_kernel,
        out_shape=jax.ShapeDtypeStruct((N, S, L), tokens.dtype),
        grid_spec=pltpu.PrefetchScalarGridSpec(
            num_scalar_prefetch=1,
            grid=(1,),
            in_specs=[
                # Whole token tensor in one VMEM-resident block (N * 4 KiB).
                pl.BlockSpec((N, S, L), lambda i, perm_ref: (0, 0, 0)),
            ],
            out_specs=pl.BlockSpec((N, S, L), lambda i, perm_ref: (0, 0, 0)),
        ),
        compiler_params=pltpu.CompilerParams(
            dimension_semantics=("arbitrary",),
        ),
    )(perm, tokens)

    # Image passes through unchanged — returning it directly avoids a full
    # read+write of the image over HBM plus an extra kernel launch.
    return img, tok_out


def make_permutation(key, num_tokens, keep_token_num):
    """Fixed tokens keep their position; flex tokens are shuffled."""
    keep = jnp.arange(keep_token_num, dtype=jnp.int32)
    num_flex = num_tokens - keep_token_num
    flex = jax.random.permutation(key, num_flex).astype(jnp.int32) + keep_token_num
    return jnp.concatenate([keep, flex], axis=0)


if __name__ == "__main__":
    key = jax.random.PRNGKey(0)
    k_img, k_tok, k_perm = jax.random.split(key, 3)

    # Small, deterministic example inputs.
    batch, channels, spatial = 2, 4, 16
    num_tokens, keep_token_num = 8, 2

    img = jax.random.normal(k_img, (batch, channels, spatial, spatial), jnp.float32)
    # Encoded prompt: one (8, 128) int32 block of "character codes" per token.
    tokens = jax.random.randint(k_tok, (num_tokens, 8, 128), 32, 127, jnp.int32)

    perm = make_permutation(k_perm, num_tokens, keep_token_num)

    img_out, tok_out = shuffle_caption(img, tokens, perm)
    jax.block_until_ready((img_out, tok_out))

    # Reference check.
    assert jnp.array_equal(img_out, img), "image must pass through unchanged"
    expected_tok = jnp.take(tokens, perm, axis=0)
    assert jnp.array_equal(tok_out, expected_tok), "token shuffle mismatch"
    # Fixed prefix must be untouched.
    assert jnp.array_equal(tok_out[:keep_token_num], tokens[:keep_token_num])

    print("KERNEL_OK")
</pallas_src>

<mosaic_0001>
module attributes {stable_mosaic.version = 11 : i64} {
  func.func @_shuffle_tokens_kernel(%arg0: i32, %arg1: memref<8xi32, #tpu.memory_space<smem>>, %arg2: memref<8x8x128xi32, #tpu.memory_space<vmem>>, %arg3: memref<8x8x128xi32, #tpu.memory_space<vmem>>) attributes {dimension_semantics = [#tpu.dimension_semantics<arbitrary>], iteration_bounds = array<i64: 1>, scalar_prefetch = 1 : i64, scratch_operands = 0 : i64, tpu.core_type = #tpu.core_type<tc>, window_params = [{pipeline_mode = #tpu.pipeline_mode<synchronous>, transform_indices = @transform_0, window_bounds = array<i64: 8, 8, 128>}, {pipeline_mode = #tpu.pipeline_mode<synchronous>, transform_indices = @transform_1, window_bounds = array<i64: 8, 8, 128>}]} {
    %c0_i32 = arith.constant 0 : i32
    %0 = arith.index_cast %c0_i32 : i32 to index
    %1 = memref.load %arg1[%0] : memref<8xi32, #tpu.memory_space<smem>>
    %2 = arith.index_cast %1 : i32 to index
    %c0 = arith.constant 0 : index
    %c0_0 = arith.constant 0 : index
    %3 = vector.load %arg2[%2, %c0, %c0_0] : memref<8x8x128xi32, #tpu.memory_space<vmem>>, vector<1x8x128xi32>
    %4 = vector.shape_cast %3 : vector<1x8x128xi32> to vector<8x128xi32>
    %5 = arith.index_cast %c0_i32 : i32 to index
    %c0_1 = arith.constant 0 : index
    %c0_2 = arith.constant 0 : index
    %6 = vector.load %arg3[%5, %c0_1, %c0_2] : memref<8x8x128xi32, #tpu.memory_space<vmem>>, vector<1x8x128xi32>
    %7 = vector.shape_cast %6 : vector<1x8x128xi32> to vector<8x128xi32>
    %8 = vector.shape_cast %4 : vector<8x128xi32> to vector<1x8x128xi32>
    tpu.vector_store %arg3[%5, %c0_1, %c0_2], %8 {strides = array<i32>} : memref<8x8x128xi32, #tpu.memory_space<vmem>>, vector<1x8x128xi32>,
    %c1_i32 = arith.constant 1 : i32
    %9 = arith.index_cast %c1_i32 : i32 to index
    %10 = memref.load %arg1[%9] : memref<8xi32, #tpu.memory_space<smem>>
    %11 = arith.index_cast %10 : i32 to index
    %c0_3 = arith.constant 0 : index
    %c0_4 = arith.constant 0 : index
    %12 = vector.load %arg2[%11, %c0_3, %c0_4] : memref<8x8x128xi32, #tpu.memory_space<vmem>>, vector<1x8x128xi32>
    %13 = vector.shape_cast %12 : vector<1x8x128xi32> to vector<8x128xi32>
    %14 = arith.index_cast %c1_i32 : i32 to index
    %c0_5 = arith.constant 0 : index
    %c0_6 = arith.constant 0 : index
    %15 = vector.load %arg3[%14, %c0_5, %c0_6] : memref<8x8x128xi32, #tpu.memory_space<vmem>>, vector<1x8x128xi32>
    %16 = vector.shape_cast %15 : vector<1x8x128xi32> to vector<8x128xi32>
    %17 = vector.shape_cast %13 : vector<8x128xi32> to vector<1x8x128xi32>
    tpu.vector_store %arg3[%14, %c0_5, %c0_6], %17 {strides = array<i32>} : memref<8x8x128xi32, #tpu.memory_space<vmem>>, vector<1x8x128xi32>,
    %c2_i32 = arith.constant 2 : i32
    %18 = arith.index_cast %c2_i32 : i32 to index
    %19 = memref.load %arg1[%18] : memref<8xi32, #tpu.memory_space<smem>>
    %20 = arith.index_cast %19 : i32 to index
    %c0_7 = arith.constant 0 : index
    %c0_8 = arith.constant 0 : index
    %21 = vector.load %arg2[%20, %c0_7, %c0_8] : memref<8x8x128xi32, #tpu.memory_space<vmem>>, vector<1x8x128xi32>
    %22 = vector.shape_cast %21 : vector<1x8x128xi32> to vector<8x128xi32>
    %23 = arith.index_cast %c2_i32 : i32 to index
    %c0_9 = arith.constant 0 : index
    %c0_10 = arith.constant 0 : index
    %24 = vector.load %arg3[%23, %c0_9, %c0_10] : memref<8x8x128xi32, #tpu.memory_space<vmem>>, vector<1x8x128xi32>
    %25 = vector.shape_cast %24 : vector<1x8x128xi32> to vector<8x128xi32>
    %26 = vector.shape_cast %22 : vector<8x128xi32> to vector<1x8x128xi32>
    tpu.vector_store %arg3[%23, %c0_9, %c0_10], %26 {strides = array<i32>} : memref<8x8x128xi32, #tpu.memory_space<vmem>>, vector<1x8x128xi32>,
    %c3_i32 = arith.constant 3 : i32
    %27 = arith.index_cast %c3_i32 : i32 to index
    %28 = memref.load %arg1[%27] : memref<8xi32, #tpu.memory_space<smem>>
    %29 = arith.index_cast %28 : i32 to index
    %c0_11 = arith.constant 0 : index
    %c0_12 = arith.constant 0 : index
    %30 = vector.load %arg2[%29, %c0_11, %c0_12] : memref<8x8x128xi32, #tpu.memory_space<vmem>>, vector<1x8x128xi32>
    %31 = vector.shape_cast %30 : vector<1x8x128xi32> to vector<8x128xi32>
    %32 = arith.index_cast %c3_i32 : i32 to index
    %c0_13 = arith.constant 0 : index
    %c0_14 = arith.constant 0 : index
    %33 = vector.load %arg3[%32, %c0_13, %c0_14] : memref<8x8x128xi32, #tpu.memory_space<vmem>>, vector<1x8x128xi32>
    %34 = vector.shape_cast %33 : vector<1x8x128xi32> to vector<8x128xi32>
    %35 = vector.shape_cast %31 : vector<8x128xi32> to vector<1x8x128xi32>
    tpu.vector_store %arg3[%32, %c0_13, %c0_14], %35 {strides = array<i32>} : memref<8x8x128xi32, #tpu.memory_space<vmem>>, vector<1x8x128xi32>,
    %c4_i32 = arith.constant 4 : i32
    %36 = arith.index_cast %c4_i32 : i32 to index
    %37 = memref.load %arg1[%36] : memref<8xi32, #tpu.memory_space<smem>>
    %38 = arith.index_cast %37 : i32 to index
    %c0_15 = arith.constant 0 : index
    %c0_16 = arith.constant 0 : index
    %39 = vector.load %arg2[%38, %c0_15, %c0_16] : memref<8x8x128xi32, #tpu.memory_space<vmem>>, vector<1x8x128xi32>
    %40 = vector.shape_cast %39 : vector<1x8x128xi32> to vector<8x128xi32>
    %41 = arith.index_cast %c4_i32 : i32 to index
    %c0_17 = arith.constant 0 : index
    %c0_18 = arith.constant 0 : index
    %42 = vector.load %arg3[%41, %c0_17, %c0_18] : memref<8x8x128xi32, #tpu.memory_space<vmem>>, vector<1x8x128xi32>
    %43 = vector.shape_cast %42 : vector<1x8x128xi32> to vector<8x128xi32>
    %44 = vector.shape_cast %40 : vector<8x128xi32> to vector<1x8x128xi32>
    tpu.vector_store %arg3[%41, %c0_17, %c0_18], %44 {strides = array<i32>} : memref<8x8x128xi32, #tpu.memory_space<vmem>>, vector<1x8x128xi32>,
    %c5_i32 = arith.constant 5 : i32
    %45 = arith.index_cast %c5_i32 : i32 to index
    %46 = memref.load %arg1[%45] : memref<8xi32, #tpu.memory_space<smem>>
    %47 = arith.index_cast %46 : i32 to index
    %c0_19 = arith.constant 0 : index
    %c0_20 = arith.constant 0 : index
    %48 = vector.load %arg2[%47, %c0_19, %c0_20] : memref<8x8x128xi32, #tpu.memory_space<vmem>>, vector<1x8x128xi32>
    %49 = vector.shape_cast %48 : vector<1x8x128xi32> to vector<8x128xi32>
    %50 = arith.index_cast %c5_i32 : i32 to index
    %c0_21 = arith.constant 0 : index
    %c0_22 = arith.constant 0 : index
    %51 = vector.load %arg3[%50, %c0_21, %c0_22] : memref<8x8x128xi32, #tpu.memory_space<vmem>>, vector<1x8x128xi32>
    %52 = vector.shape_cast %51 : vector<1x8x128xi32> to vector<8x128xi32>
    %53 = vector.shape_cast %49 : vector<8x128xi32> to vector<1x8x128xi32>
    tpu.vector_store %arg3[%50, %c0_21, %c0_22], %53 {strides = array<i32>} : memref<8x8x128xi32, #tpu.memory_space<vmem>>, vector<1x8x128xi32>,
    %c6_i32 = arith.constant 6 : i32
    %54 = arith.index_cast %c6_i32 : i32 to index
    %55 = memref.load %arg1[%54] : memref<8xi32, #tpu.memory_space<smem>>
    %56 = arith.index_cast %55 : i32 to index
    %c0_23 = arith.constant 0 : index
    %c0_24 = arith.constant 0 : index
    %57 = vector.load %arg2[%56, %c0_23, %c0_24] : memref<8x8x128xi32, #tpu.memory_space<vmem>>, vector<1x8x128xi32>
    %58 = vector.shape_cast %57 : vector<1x8x128xi32> to vector<8x128xi32>
    %59 = arith.index_cast %c6_i32 : i32 to index
    %c0_25 = arith.constant 0 : index
    %c0_26 = arith.constant 0 : index
    %60 = vector.load %arg3[%59, %c0_25, %c0_26] : memref<8x8x128xi32, #tpu.memory_space<vmem>>, vector<1x8x128xi32>
    %61 = vector.shape_cast %60 : vector<1x8x128xi32> to vector<8x128xi32>
    %62 = vector.shape_cast %58 : vector<8x128xi32> to vector<1x8x128xi32>
    tpu.vector_store %arg3[%59, %c0_25, %c0_26], %62 {strides = array<i32>} : memref<8x8x128xi32, #tpu.memory_space<vmem>>, vector<1x8x128xi32>,
    %c7_i32 = arith.constant 7 : i32
    %63 = arith.index_cast %c7_i32 : i32 to index
    %64 = memref.load %arg1[%63] : memref<8xi32, #tpu.memory_space<smem>>
    %65 = arith.index_cast %64 : i32 to index
    %c0_27 = arith.constant 0 : index
    %c0_28 = arith.constant 0 : index
    %66 = vector.load %arg2[%65, %c0_27, %c0_28] : memref<8x8x128xi32, #tpu.memory_space<vmem>>, vector<1x8x128xi32>
    %67 = vector.shape_cast %66 : vector<1x8x128xi32> to vector<8x128xi32>
    %68 = arith.index_cast %c7_i32 : i32 to index
    %c0_29 = arith.constant 0 : index
    %c0_30 = arith.constant 0 : index
    %69 = vector.load %arg3[%68, %c0_29, %c0_30] : memref<8x8x128xi32, #tpu.memory_space<vmem>>, vector<1x8x128xi32>
    %70 = vector.shape_cast %69 : vector<1x8x128xi32> to vector<8x128xi32>
    %71 = vector.shape_cast %67 : vector<8x128xi32> to vector<1x8x128xi32>
    tpu.vector_store %arg3[%68, %c0_29, %c0_30], %71 {strides = array<i32>} : memref<8x8x128xi32, #tpu.memory_space<vmem>>, vector<1x8x128xi32>,
    %c8_i32 = arith.constant 8 : i32
    return
  }
  func.func @transform_0(%arg0: i32, %arg1: memref<8xi32, #tpu.memory_space<smem>>) -> (i32, i32, i32) {
    %c0_i32 = arith.constant 0 : i32
    %c0_i32_0 = arith.constant 0 : i32
    %c0_i32_1 = arith.constant 0 : i32
    %c0_i32_2 = arith.constant 0 : i32
    return %c0_i32, %c0_i32_0, %c0_i32_1 : i32, i32, i32
  }
  func.func @transform_1(%arg0: i32, %arg1: memref<8xi32, #tpu.memory_space<smem>>) -> (i32, i32, i32) {
    %c0_i32 = arith.constant 0 : i32
    %c0_i32_0 = arith.constant 0 : i32
    %c0_i32_1 = arith.constant 0 : i32
    %c0_i32_2 = arith.constant 0 : i32
    return %c0_i32, %c0_i32_0, %c0_i32_1 : i32, i32, i32
  }
}

</mosaic_0001>

<llo_original>
// kernel: tpu_custom_call.1
$region0: #{tpu_custom_call.1}
  #allocation0 [shape = 'u32[]', space=smem, size = 0x4, offset = 0x4, fixed_abs, tag = 'smem constant byte address 0x4 - core index']
  #allocation1 [shape = 'u32[144,128]{1,0:T(1,128)}', space=vmem, size = 0x12000, scoped, tag = 'internal scratch']
  #allocation2 [shape = 's32[1]{0}', space=sflag, size = 0x4, scoped, tag = 'scoped memory for tpu_custom_call.1']
  #allocation3 [shape = 'u8[512]{0}', space=smem, size = 0x200, scoped, tag = 'prefetched SMEM operand 0']
  %s0 = inlined_call_operand.hbm [shape: s32[8], index: 0, kind: input, shape index: {}]
  %s1 = inlined_call_operand.hbm [shape: s32[8,8,128], index: 1, kind: input, shape index: {}]
  %s2 = inlined_call_operand.hbm [shape: s32[8,8,128], index: 2, kind: output, shape index: {}]
  %s3 = sld [smem:[#allocation0]]
  $region18: #{tpu_custom_call.1} parent=0
    _
  %s5 = ssub.s32 1, %s3
  %s6 = scalar_select 0, %s5, %s3
  %8 = dma.hbm_to_smem %s0, 16, [#allocation3], [#allocation2]
  %9 = dma.done [#allocation2], 16
  %10 = sfence
  $region1: #{tpu_custom_call.1} parent=0
    #allocation4 [shape = 'u8[32768]{0}', space=vmem, size = 0x8000, scoped, tag = 'input window, operand 1, single buffered']
    #allocation5 [shape = 's32[1]{0}', space=sflag, size = 0x4, scoped, tag = 'scoped memory for tpu_custom_call.1']
    #allocation6 [shape = 's32[1]{0}', space=sflag, size = 0x4, scoped, tag = 'scoped memory for tpu_custom_call.1']
    #allocation7 [shape = 'u8[32768]{0}', space=vmem, size = 0x8000, scoped, tag = 'output window, operand 0, single buffered']
    %11 = vsyncpa [#allocation5], 0
    %12 = vsyncpa [#allocation6], 0
    // Predicated region
    $region2: #{tpu_custom_call.1} parent=1 // pred_check
      _
    $region3: #{tpu_custom_call.1} parent=1 // pred_check_branch
      %14 = sbr.rel (0) target = $region5
    $region4: #{tpu_custom_call.1} parent=1 // pred_region
      %s16 = ssub.s32 1024, 1024
      %17 = vsyncadd [#allocation5], %s16
      %s18 = sshll.u32 [#allocation4], 4
      %s19 = int_to_ptr.vmem [resolvable:$true] %s18
      %24 = dma.hbm_to_vmem [thread:$0]  %s1, 1024, %s19, [#allocation5], 128, 128, 8
    $region5: #{tpu_custom_call.1} parent=1 // pred_fallthru
      _
    // Predicated region
    $region6: #{tpu_custom_call.1} parent=1 // pred_check
      _
    $region7: #{tpu_custom_call.1} parent=1 // pred_check_branch
      %26 = sbr.rel (0) target = $region9
    $region8: #{tpu_custom_call.1} parent=1 // pred_region
      %27 = dma.done [#allocation5], 1024
    $region9: #{tpu_custom_call.1} parent=1 // pred_fallthru
      _
    %s28 = sld [smem:[#allocation3]]
    %s29 = smul.u32 %s28, 8
    %s30 = scalar_lea.vmem [#allocation4], %s29
    %v31 = vld [vmem:[%s30] sm:$0xff]
    %32 = vst [vmem:[#allocation7] sm:$0xff] %v31
    %s33 = sld [smem:[#allocation3 + $0x1]]
    %s34 = smul.u32 %s33, 8
    %s35 = scalar_lea.vmem [#allocation4], %s34
    %v36 = vld [vmem:[%s35] sm:$0xff]
    %s37 = scalar_lea.vmem [#allocation7], 8
    %38 = vst [vmem:[%s37] sm:$0xff] %v36
    %s39 = sld [smem:[#allocation3 + $0x2]]
    %s40 = smul.u32 %s39, 8
    %s41 = scalar_lea.vmem [#allocation4], %s40
    %v42 = vld [vmem:[%s41] sm:$0xff]
    %s43 = scalar_lea.vmem [#allocation7], 16
    %44 = vst [vmem:[%s43] sm:$0xff] %v42
    %s45 = sld [smem:[#allocation3 + $0x3]]
    %s46 = smul.u32 %s45, 8
    %s47 = scalar_lea.vmem [#allocation4], %s46
    %v48 = vld [vmem:[%s47] sm:$0xff]
    %s49 = scalar_lea.vmem [#allocation7], 24
    %50 = vst [vmem:[%s49] sm:$0xff] %v48
    %s51 = sld [smem:[#allocation3 + $0x4]]
    %s52 = smul.u32 %s51, 8
    %s53 = scalar_lea.vmem [#allocation4], %s52
    %v54 = vld [vmem:[%s53] sm:$0xff]
    %s55 = scalar_lea.vmem [#allocation7], 32
    %56 = vst [vmem:[%s55] sm:$0xff] %v54
    %s57 = sld [smem:[#allocation3 + $0x5]]
    %s58 = smul.u32 %s57, 8
    %s59 = scalar_lea.vmem [#allocation4], %s58
    %v60 = vld [vmem:[%s59] sm:$0xff]
    %s61 = scalar_lea.vmem [#allocation7], 40
    %62 = vst [vmem:[%s61] sm:$0xff] %v60
    %s63 = sld [smem:[#allocation3 + $0x6]]
    %s64 = smul.u32 %s63, 8
    %s65 = scalar_lea.vmem [#allocation4], %s64
    %v66 = vld [vmem:[%s65] sm:$0xff]
    %s67 = scalar_lea.vmem [#allocation7], 48
    %68 = vst [vmem:[%s67] sm:$0xff] %v66
    %s69 = sld [smem:[#allocation3 + $0x7]]
    %s70 = smul.u32 %s69, 8
    %s71 = scalar_lea.vmem [#allocation4], %s70
    %v72 = vld [vmem:[%s71] sm:$0xff]
    %s73 = scalar_lea.vmem [#allocation7], 56
    %74 = vst [vmem:[%s73] sm:$0xff] %v72
    // Predicated region
    $region10: #{tpu_custom_call.1} parent=1 // pred_check
      _
    $region11: #{tpu_custom_call.1} parent=1 // pred_check_branch
      %76 = sbr.rel (0) target = $region13
    $region12: #{tpu_custom_call.1} parent=1 // pred_region
      %s78 = ssub.s32 1024, 1024
      %79 = vsyncadd [#allocation6], %s78
      %s80 = sshll.u32 [#allocation7], 4
      %s81 = int_to_ptr.vmem [resolvable:$true] %s80
      %86 = dma.vmem_to_hbm [thread:$0]  %s81, 1024, %s2, [#allocation6], 128, 128, 8
    $region13: #{tpu_custom_call.1} parent=1 // pred_fallthru
      _
    // Predicated region
    $region14: #{tpu_custom_call.1} parent=1 // pred_check
      _
    $region15: #{tpu_custom_call.1} parent=1 // pred_check_branch
      %88 = sbr.rel (0) target = $region17
    $region16: #{tpu_custom_call.1} parent=1 // pred_region
      %89 = dma.done [#allocation6], 1024
    $region17: #{tpu_custom_call.1} parent=1 // pred_fallthru
      _
    %90 = vsyncpa [#allocation5], 1
    %91 = vsyncpa [#allocation6], 1

</llo_original>
